<compile_context>
chip_gen: v7x
topology: tpu7x:2x2x1
jax: 0.10.0
libtpu: 0.0.40
codegen_flags: <defaults>
</compile_context>

<pallas_src>
import math

import jax
import jax.numpy as jnp
from jax.experimental import pallas as pl
from jax.experimental.pallas import tpu as pltpu


_SQRT_2_OVER_PI = 0.7978845608028654  # sqrt(2/pi)


def _gelu_kernel(x_ref, o_ref):
    x = x_ref[...]
    # bf16 compute is native on v6e/v7x; everything else computes in f32.
    if x.dtype not in (jnp.float32, jnp.bfloat16):
        x = x.astype(jnp.float32)
    dt = x.dtype
    c = jnp.asarray(_SQRT_2_OVER_PI, dtype=dt)
    k = jnp.asarray(0.044715, dtype=dt)
    half = jnp.asarray(0.5, dtype=dt)
    one = jnp.asarray(1.0, dtype=dt)
    # 0.5 * x * (1 + tanh(sqrt(2/pi) * (x + 0.044715*x^3)))
    # rewritten as c * x * (1 + k*x*x) to save one VPU multiply.
    inner = c * x * (one + k * x * x)
    # TODO(synk): on v7x, if the bundle dump shows the EUP slot binding on
    # tanh, rewrite as exp(2z) + pl.reciprocal(approx=True); decide from dump.
    y = half * x * (one + jnp.tanh(inner))
    o_ref[...] = y.astype(o_ref.dtype)


def _xla_gelu(v):
    """Plain-XLA tanh-GELU for sub-128-element tails (rare, awkward shapes)."""
    vf = v.astype(jnp.float32)
    c = jnp.float32(_SQRT_2_OVER_PI)
    y = 0.5 * vf * (1.0 + jnp.tanh(c * vf * (1.0 + 0.044715 * vf * vf)))
    return y.astype(v.dtype)


def _gelu_2d(x2d, *, block_rows, vmem_limit_bytes):
    rows, w = x2d.shape
    n = rows * w
    itemsize = jnp.dtype(x2d.dtype).itemsize
    cost = pl.CostEstimate(
        flops=10 * n, transcendentals=n, bytes_accessed=2 * n * itemsize
    )
    return pl.pallas_call(
        _gelu_kernel,
        out_shape=jax.ShapeDtypeStruct((rows, w), x2d.dtype),
        grid_spec=pltpu.PrefetchScalarGridSpec(
            num_scalar_prefetch=0,
            grid=(pl.cdiv(rows, block_rows),),
            in_specs=[pl.BlockSpec((block_rows, w), lambda i: (i, 0))],
            out_specs=pl.BlockSpec((block_rows, w), lambda i: (i, 0)),
        ),
        compiler_params=pltpu.CompilerParams(
            dimension_semantics=("parallel",),
            # 2 arrays x 2 buffers x ~8 MiB tile = ~32 MiB in flight; keep
            # headroom under v7x's 64 MiB physical VMEM (plenty on v5e/v6e).
            vmem_limit_bytes=vmem_limit_bytes,
        ),
        cost_estimate=cost,
    )(x2d)


def gelu_pallas(x, *, target_tile_bytes=8 * 1024 * 1024,
                vmem_limit_bytes=48 * 1024 * 1024):
    """Tanh-approx GELU: 0.5*x*(1+tanh(sqrt(2/pi)*(x+0.044715*x^3))).

    Exactly the formula implemented by the reference PyTorch module (which is
    the tanh approximation, not erf-based nn.GELU()).
    """
    orig_shape = x.shape
    dtype = x.dtype
    n = math.prod(orig_shape)
    if n == 0:
        return x
    itemsize = jnp.dtype(dtype).itemsize
    sublane = max(8, 32 // itemsize)  # 8 for f32, 16 for bf16, 32 for int8/fp8

    def block_rows_for(rows, width):
        br = (target_tile_bytes // (width * itemsize)) // sublane * sublane
        br = max(sublane, br)
        if br >= rows:
            return rows  # full-extent rows block (always legal)
        return br        # multiple of sublane; partial last block is masked

    # --- Primary path: zero-copy lane-dense view (rows, w), rows*w == n. ---
    w = None
    if n % 128 == 0:
        for cand in (4096, 2048, 1024, 512, 384, 256, 128):
            if n % cand == 0:
                w = cand
                break

    if w is not None:
        rows = n // w
        x2d = x.reshape(rows, w)  # contiguous reshape, no data movement
        out = _gelu_2d(x2d, block_rows=block_rows_for(rows, w),
                       vmem_limit_bytes=vmem_limit_bytes)
        return out.reshape(orig_shape)

    # --- Awkward total (n % 128 != 0): no full-array pad. Run the divisible
    #     bulk through the kernel; handle the <w-element tail in plain XLA. ---
    flat = x.reshape(-1)
    w = 1024 if n >= 1024 else 128
    bulk = (n // w) * w
    if bulk == 0:
        return _xla_gelu(flat).reshape(orig_shape)
    rows = bulk // w
    bulk_out = _gelu_2d(flat[:bulk].reshape(rows, w),
                        block_rows=block_rows_for(rows, w),
                        vmem_limit_bytes=vmem_limit_bytes)
    tail_out = _xla_gelu(flat[bulk:])
    return jnp.concatenate([bulk_out.reshape(-1), tail_out]).reshape(orig_shape)


def gelu_ref(x):
    xf = x.astype(jnp.float32)
    c = jnp.sqrt(jnp.float32(2.0 / jnp.pi))
    return (0.5 * xf * (1.0 + jnp.tanh(c * (xf + 0.044715 * xf ** 3)))).astype(x.dtype)


if __name__ == "__main__":
    # Small transformer-style activation: batch=2, seq=8, hidden=32
    x = jax.random.normal(jax.random.PRNGKey(0), (2, 8, 32), dtype=jnp.float32)
    y = gelu_pallas(x)
    jax.block_until_ready(y)
    assert y.shape == x.shape and y.dtype == x.dtype
    assert jnp.allclose(y, gelu_ref(x), atol=1e-5, rtol=1e-5), "mismatch vs reference"

    # Awkward total size (n % 128 != 0): bulk kernel + XLA tail, no padding.
    x2 = jax.random.normal(jax.random.PRNGKey(1), (3, 7, 33), dtype=jnp.float32)
    y2 = gelu_pallas(x2)
    jax.block_until_ready(y2)
    assert jnp.allclose(y2, gelu_ref(x2), atol=1e-5, rtol=1e-5), "mismatch (bulk+tail path)"

    # bf16 path: bf16-native compute in-kernel (looser tolerance vs f32 ref).
    x3 = jax.random.normal(jax.random.PRNGKey(2), (4, 16, 256), dtype=jnp.bfloat16)
    y3 = gelu_pallas(x3)
    jax.block_until_ready(y3)
    assert y3.dtype == jnp.bfloat16
    assert jnp.allclose(y3.astype(jnp.float32), gelu_ref(x3).astype(jnp.float32),
                        atol=1e-2, rtol=5e-2), "mismatch (bf16 path)"

    print("KERNEL_OK")
</pallas_src>

<mosaic_0001>
module attributes {stable_mosaic.version = 11 : i64} {
  func.func @_gelu_kernel(%arg0: i32, %arg1: memref<1x512xf32, #tpu.memory_space<vmem>>, %arg2: memref<1x512xf32, #tpu.memory_space<vmem>>) attributes {dimension_semantics = [#tpu.dimension_semantics<parallel>], iteration_bounds = array<i64: 1>, scalar_prefetch = 0 : i64, scratch_operands = 0 : i64, tpu.core_type = #tpu.core_type<tc>, window_params = [{transform_indices = @transform_0, window_bounds = array<i64: 1, 512>}, {transform_indices = @transform_1, window_bounds = array<i64: 1, 512>}]} {
    %c0 = arith.constant 0 : index
    %c0_0 = arith.constant 0 : index
    %0 = vector.load %arg1[%c0, %c0_0] : memref<1x512xf32, #tpu.memory_space<vmem>>, vector<1x512xf32>
    %cst = arith.constant 0.797884583 : f32
    %1 = vector.broadcast %cst : f32 to vector<1x512xf32>
    %2 = arith.mulf %1, %0 : vector<1x512xf32>
    %cst_1 = arith.constant 4.471500e-02 : f32
    %3 = vector.broadcast %cst_1 : f32 to vector<1x512xf32>
    %4 = arith.mulf %3, %0 : vector<1x512xf32>
    %5 = arith.mulf %4, %0 : vector<1x512xf32>
    %cst_2 = arith.constant 1.000000e+00 : f32
    %6 = vector.broadcast %cst_2 : f32 to vector<1x512xf32>
    %7 = arith.addf %6, %5 : vector<1x512xf32>
    %8 = arith.mulf %2, %7 : vector<1x512xf32>
    %cst_3 = arith.constant 5.000000e-01 : f32
    %9 = vector.broadcast %cst_3 : f32 to vector<1x512xf32>
    %10 = arith.mulf %9, %0 : vector<1x512xf32>
    %11 = math.tanh %8 : vector<1x512xf32>
    %cst_4 = arith.constant 1.000000e+00 : f32
    %12 = vector.broadcast %cst_4 : f32 to vector<1x512xf32>
    %13 = arith.addf %12, %11 : vector<1x512xf32>
    %14 = arith.mulf %10, %13 : vector<1x512xf32>
    %c0_5 = arith.constant 0 : index
    %c0_6 = arith.constant 0 : index
    %15 = vector.load %arg2[%c0_5, %c0_6] : memref<1x512xf32, #tpu.memory_space<vmem>>, vector<1x512xf32>
    tpu.vector_store %arg2[%c0_5, %c0_6], %14 {strides = array<i32>} : memref<1x512xf32, #tpu.memory_space<vmem>>, vector<1x512xf32>,
    return
  }
  func.func @transform_0(%arg0: i32) -> (i32, i32) {
    %c0_i32 = arith.constant 0 : i32
    %c0_i32_0 = arith.constant 0 : i32
    return %arg0, %c0_i32 : i32, i32
  }
  func.func @transform_1(%arg0: i32) -> (i32, i32) {
    %c0_i32 = arith.constant 0 : i32
    %c0_i32_0 = arith.constant 0 : i32
    return %arg0, %c0_i32 : i32, i32
  }
}

</mosaic_0001>

<llo_original>
// kernel: tpu_custom_call.1
$region0: #{tpu_custom_call.1}
  #allocation0 [shape = 'u32[]', space=smem, size = 0x4, offset = 0x4, fixed_abs, tag = 'smem constant byte address 0x4 - core index']
  #allocation1 [shape = 'u32[144,128]{1,0:T(1,128)}', space=vmem, size = 0x12000, scoped, tag = 'internal scratch']
  %s0 = inlined_call_operand.hbm [shape: f32[1,512], index: 0, kind: input, shape index: {}]
  %s1 = inlined_call_operand.hbm [shape: f32[1,512], index: 1, kind: output, shape index: {}]
  %s2 = sld [smem:[#allocation0]]
  $region18: #{tpu_custom_call.1} parent=0
    _
  %s4 = ssub.s32 1, %s2
  %s5 = scalar_select 0, %s4, %s2
  $region1: #{tpu_custom_call.1} parent=0
    #allocation2 [shape = 'u8[2048]{0}', space=vmem, size = 0x800, scoped, tag = 'input window, operand 0, single buffered']
    #allocation3 [shape = 's32[1]{0}', space=sflag, size = 0x4, scoped, tag = 'scoped memory for tpu_custom_call.1']
    #allocation4 [shape = 's32[1]{0}', space=sflag, size = 0x4, scoped, tag = 'scoped memory for tpu_custom_call.1']
    #allocation5 [shape = 'u8[2048]{0}', space=vmem, size = 0x800, scoped, tag = 'output window, operand 0, single buffered']
    %6 = vsyncpa [#allocation3], 0
    %7 = vsyncpa [#allocation4], 0
    // Predicated region
    $region2: #{tpu_custom_call.1} parent=1 // pred_check
      _
    $region3: #{tpu_custom_call.1} parent=1 // pred_check_branch
      %9 = sbr.rel (0) target = $region5
    $region4: #{tpu_custom_call.1} parent=1 // pred_region
      %s11 = ssub.s32 64, 64
      %12 = vsyncadd [#allocation3], %s11
      %s14 = sshll.u32 [#allocation2], 4
      %s15 = int_to_ptr.vmem [resolvable:$true] %s14
      %17 = dma.hbm_to_vmem [thread:$0]  %s0, 64, %s15, [#allocation3]
    $region5: #{tpu_custom_call.1} parent=1 // pred_fallthru
      _
    // Predicated region
    $region6: #{tpu_custom_call.1} parent=1 // pred_check
      _
    $region7: #{tpu_custom_call.1} parent=1 // pred_check_branch
      %19 = sbr.rel (0) target = $region9
    $region8: #{tpu_custom_call.1} parent=1 // pred_region
      %20 = dma.done [#allocation3], 64
    $region9: #{tpu_custom_call.1} parent=1 // pred_fallthru
      _
    %v21 = vld [vmem:[#allocation2] sm:$0xf]
    %v22 = vmul.f32 %v21, 0.7978846
    %v23 = vmul.f32 %v21, 0.044715
    %v24 = vmul.f32 %v23, %v21
    %v25 = vadd.f32 %v24, 1.0
    %v26 = vmul.f32 %v22, %v25
    %v27 = vmul.f32 %v21, 0.5
    %v28 = vtanh.pop %v26
    %v29 = vadd.f32 %v28, 1.0
    %v30 = vmul.f32 %v27, %v29
    %v31 = vlaneseq
    %vm32 = vcmp.ge.s32.totalorder %v31, 0
    %vm33 = vcmp.lt.s32.totalorder %v31, 512
    %vm34 = vmand %vm32, %vm33
    %35 = vst.msk [vmem:[#allocation5] sm:$0xf] %vm34, %v30
    // Predicated region
    $region10: #{tpu_custom_call.1} parent=1 // pred_check
      _
    $region11: #{tpu_custom_call.1} parent=1 // pred_check_branch
      %37 = sbr.rel (0) target = $region13
    $region12: #{tpu_custom_call.1} parent=1 // pred_region
      %s39 = ssub.s32 64, 64
      %40 = vsyncadd [#allocation4], %s39
      %s42 = sshll.u32 [#allocation5], 4
      %s43 = int_to_ptr.vmem [resolvable:$true] %s42
      %45 = dma.vmem_to_hbm [thread:$0]  %s43, 64, %s1, [#allocation4]
    $region13: #{tpu_custom_call.1} parent=1 // pred_fallthru
      _
    // Predicated region
    $region14: #{tpu_custom_call.1} parent=1 // pred_check
      _
    $region15: #{tpu_custom_call.1} parent=1 // pred_check_branch
      %47 = sbr.rel (0) target = $region17
    $region16: #{tpu_custom_call.1} parent=1 // pred_region
      %48 = dma.done [#allocation4], 64
    $region17: #{tpu_custom_call.1} parent=1 // pred_fallthru
      _
    %49 = vsyncpa [#allocation3], 1
    %50 = vsyncpa [#allocation4], 1

</llo_original>
